<compile_context>
chip_gen: v7x
topology: tpu7x:2x2x1
jax: 0.10.0
libtpu: 0.0.40
codegen_flags: <defaults>
</compile_context>

<pallas_src>
import functools

import jax
import jax.numpy as jnp
from jax.experimental import pallas as pl
from jax.experimental.pallas import tpu as pltpu

LANE = 128      # lane width: hidden/output feature dims padded to this
SUBLANE = 8     # sublane granularity for the batch tile
TINY_BATCH = 64  # below this, fused XLA beats kernel-launch + weight-DMA fixed cost


def _round_up(n, m):
    return ((n + m - 1) // m) * m


def _pad2d(a, rows, cols):
    return jnp.pad(a, ((0, rows - a.shape[0]), (0, cols - a.shape[1])))


# ----------------------------------------------------------------------------- kernel
def _actor_kernel(x_ref, w1_ref, b1_ref, w2_ref, b2_ref, w3_ref, b3_ref,
                  o_ref, *, max_action):
    # One batch tile per grid step; weights/biases use constant index_maps so they
    # are DMA'd into VMEM once and stay resident across all batch tiles.
    x = x_ref[...]
    h1 = jnp.maximum(
        jnp.dot(x, w1_ref[...], preferred_element_type=jnp.float32) + b1_ref[...], 0.0)
    h2 = jnp.maximum(
        jnp.dot(h1, w2_ref[...], preferred_element_type=jnp.float32) + b2_ref[...], 0.0)
    y = jnp.dot(h2, w3_ref[...], preferred_element_type=jnp.float32) + b3_ref[...]
    o_ref[...] = max_action * jnp.tanh(y)


# ----------------------------------------------------------------------------- params
def init_actor_params(key, state_dim, action_dim, h1=100, h2=100):
    """Synthetic parameters matching nn.Linear (stored transposed: (in, out))."""
    keys = jax.random.split(key, 6)

    def lin(kw, kb, fan_in, fan_out):
        bound = 1.0 / jnp.sqrt(fan_in)  # PyTorch default U(-1/sqrt(fan_in), 1/sqrt(fan_in))
        w = jax.random.uniform(kw, (fan_in, fan_out), jnp.float32, -bound, bound)
        b = jax.random.uniform(kb, (1, fan_out), jnp.float32, -bound, bound)
        return w, b

    w1, b1 = lin(keys[0], keys[1], state_dim, h1)
    w2, b2 = lin(keys[2], keys[3], h1, h2)
    w3, b3 = lin(keys[4], keys[5], h2, action_dim)
    return {"w1": w1, "b1": b1, "w2": w2, "b2": b2, "w3": w3, "b3": b3}


def prepare_actor_params(params):
    """Pad output feature dims to 128 lanes ONCE; keep as persistent device arrays.

    The layer-1 input dim (state_dim) is left at its true width — x is streamed unpadded.
    Zero padding keeps the math exact: padded hidden lanes are relu(0)=0 and multiply zero
    weight rows downstream; padded output lanes are sliced off by the wrapper.
    """
    state_dim, h1 = params["w1"].shape
    h2 = params["w2"].shape[1]
    action_dim = params["w3"].shape[1]
    h1p = _round_up(h1, LANE)
    h2p = _round_up(h2, LANE)
    ap = _round_up(action_dim, LANE)
    padded = {
        "w1": _pad2d(params["w1"], state_dim, h1p),
        "b1": _pad2d(params["b1"], 1, h1p),
        "w2": _pad2d(params["w2"], h1p, h2p),
        "b2": _pad2d(params["b2"], 1, h2p),
        "w3": _pad2d(params["w3"], h2p, ap),
        "b3": _pad2d(params["b3"], 1, ap),
    }
    meta = {"state_dim": state_dim, "action_dim": action_dim}
    return padded, meta


# ----------------------------------------------------------------------------- forward
def _actor_pallas(x, p, action_dim, max_action, tm):
    B, state_dim = x.shape
    h1p = p["w1"].shape[1]
    h2p = p["w2"].shape[1]
    ap = p["w3"].shape[1]

    # Large batch tile amortizes the ~0.35us per-grid-step cost; shrink for tiny batches.
    # v7x note: for medium/large batches prefer a tm that keeps the grid length >= 2 so the
    # 'parallel' batch axis can split over both TensorCores (B~1000 -> tm=512 -> grid=2).
    tm = max(SUBLANE, min(tm, _round_up(B, SUBLANE)))
    grid = (pl.cdiv(B, tm),)  # ragged last tile handled by Pallas: no batch padding copy

    kernel = functools.partial(_actor_kernel, max_action=float(max_action))

    flops = 2 * B * (state_dim * h1p + h1p * h2p + h2p * ap)
    bytes_accessed = 4 * (B * state_dim + B * ap
                          + state_dim * h1p + h1p * h2p + h2p * ap + h1p + h2p + ap)

    out = pl.pallas_call(
        kernel,
        out_shape=jax.ShapeDtypeStruct((B, ap), jnp.float32),
        grid=grid,
        in_specs=[
            pl.BlockSpec((tm, state_dim), lambda i: (i, 0)),   # x streamed at true width (39)
            pl.BlockSpec((state_dim, h1p), lambda i: (0, 0)),  # w1: pinned in VMEM
            pl.BlockSpec((1, h1p), lambda i: (0, 0)),          # b1
            pl.BlockSpec((h1p, h2p), lambda i: (0, 0)),        # w2
            pl.BlockSpec((1, h2p), lambda i: (0, 0)),          # b2
            pl.BlockSpec((h2p, ap), lambda i: (0, 0)),         # w3
            pl.BlockSpec((1, ap), lambda i: (0, 0)),           # b3
        ],
        out_specs=pl.BlockSpec((tm, ap), lambda i: (i, 0)),    # lane-dense (128-wide) store
        compiler_params=pltpu.CompilerParams(
            dimension_semantics=("parallel",)),                # batch tiles across TCs (v7x)
        cost_estimate=pl.CostEstimate(
            flops=flops, transcendentals=B * ap, bytes_accessed=bytes_accessed),
    )(x, p["w1"], p["b1"], p["w2"], p["b2"], p["w3"], p["b3"])

    return out[:, :action_dim]


def _actor_xla(x, p, action_dim, max_action):
    # Fused-XLA path for tiny batches: 3-layer 100-wide MLP, no kernel-launch overhead.
    h1 = jnp.maximum(x @ p["w1"] + p["b1"], 0.0)
    h2 = jnp.maximum(h1 @ p["w2"] + p["b2"], 0.0)
    return (max_action * jnp.tanh(h2 @ p["w3"] + p["b3"]))[:, :action_dim]


def actor_forward(x, padded_params, meta, max_action, *, tm=512, force_pallas=False):
    """x: (B, state_dim) f32.  padded_params/meta from prepare_actor_params."""
    if not force_pallas and x.shape[0] <= TINY_BATCH:
        return _actor_xla(x, padded_params, meta["action_dim"], max_action)
    return _actor_pallas(x, padded_params, meta["action_dim"], max_action, tm)


def actor_reference(x, params, max_action):
    h1 = jnp.maximum(x @ params["w1"] + params["b1"], 0.0)
    h2 = jnp.maximum(h1 @ params["w2"] + params["b2"], 0.0)
    return max_action * jnp.tanh(h2 @ params["w3"] + params["b3"])


# ----------------------------------------------------------------------------- main
if __name__ == "__main__":
    state_dim = 39
    action_dim = 4
    max_action = 2.0

    key = jax.random.PRNGKey(0)
    k_x, k_p, k_xl = jax.random.split(key, 3)
    params = init_actor_params(k_p, state_dim, action_dim)
    padded_params, meta = prepare_actor_params(params)   # padded ONCE, reused every call

    # Small batch: exercise the Pallas kernel explicitly (single ragged tile).
    batch = 2
    x = jax.random.normal(k_x, (batch, state_dim), dtype=jnp.float32)
    out = jax.block_until_ready(
        actor_forward(x, padded_params, meta, max_action, force_pallas=True))
    ref = actor_reference(x, params, max_action)
    assert out.shape == (batch, action_dim)
    assert jnp.allclose(out, ref, atol=1e-5, rtol=1e-5), "mismatch vs reference (small, pallas)"

    # Same small batch through the default dispatch (fused-XLA tiny-batch path).
    out_xla = jax.block_until_ready(actor_forward(x, padded_params, meta, max_action))
    assert jnp.allclose(out_xla, ref, atol=1e-5, rtol=1e-5), "mismatch vs reference (small, xla)"

    # Larger batch: Pallas path, tm=512 -> grid=2 (ragged last tile), weights pinned in VMEM.
    batch_l = 1000
    x_l = jax.random.normal(k_xl, (batch_l, state_dim), dtype=jnp.float32)
    out_l = jax.block_until_ready(actor_forward(x_l, padded_params, meta, max_action))
    ref_l = actor_reference(x_l, params, max_action)
    assert out_l.shape == (batch_l, action_dim)
    assert jnp.allclose(out_l, ref_l, atol=1e-5, rtol=1e-5), "mismatch vs reference (large, pallas)"

    print("KERNEL_OK")
</pallas_src>

<mosaic_0001>
module attributes {stable_mosaic.version = 11 : i64} {
  func.func @_actor_kernel(%arg0: i32, %arg1: memref<8x39xf32, #tpu.memory_space<vmem>>, %arg2: memref<39x128xf32, #tpu.memory_space<vmem>>, %arg3: memref<1x128xf32, #tpu.memory_space<vmem>>, %arg4: memref<128x128xf32, #tpu.memory_space<vmem>>, %arg5: memref<1x128xf32, #tpu.memory_space<vmem>>, %arg6: memref<128x128xf32, #tpu.memory_space<vmem>>, %arg7: memref<1x128xf32, #tpu.memory_space<vmem>>, %arg8: memref<8x128xf32, #tpu.memory_space<vmem>>) attributes {dimension_semantics = [#tpu.dimension_semantics<parallel>], iteration_bounds = array<i64: 1>, scalar_prefetch = 0 : i64, scratch_operands = 0 : i64, tpu.core_type = #tpu.core_type<tc>, window_params = [{transform_indices = @transform_0, window_bounds = array<i64: 8, 39>}, {pipeline_mode = #tpu.pipeline_mode<synchronous>, transform_indices = @transform_1, window_bounds = array<i64: 39, 128>}, {pipeline_mode = #tpu.pipeline_mode<synchronous>, transform_indices = @transform_2, window_bounds = array<i64: 1, 128>}, {pipeline_mode = #tpu.pipeline_mode<synchronous>, transform_indices = @transform_3, window_bounds = array<i64: 128, 128>}, {pipeline_mode = #tpu.pipeline_mode<synchronous>, transform_indices = @transform_4, window_bounds = array<i64: 1, 128>}, {pipeline_mode = #tpu.pipeline_mode<synchronous>, transform_indices = @transform_5, window_bounds = array<i64: 128, 128>}, {pipeline_mode = #tpu.pipeline_mode<synchronous>, transform_indices = @transform_6, window_bounds = array<i64: 1, 128>}, {transform_indices = @transform_7, window_bounds = array<i64: 8, 128>}]} {
    %c0 = arith.constant 0 : index
    %c0_0 = arith.constant 0 : index
    %0 = vector.load %arg1[%c0, %c0_0] : memref<8x39xf32, #tpu.memory_space<vmem>>, vector<8x39xf32>
    %c0_1 = arith.constant 0 : index
    %c0_2 = arith.constant 0 : index
    %1 = vector.load %arg2[%c0_1, %c0_2] : memref<39x128xf32, #tpu.memory_space<vmem>>, vector<39x128xf32>
    %cst = arith.constant dense<0.000000e+00> : vector<8x128xf32>
    %2 = tpu.matmul %0, %1, %cst {dimension_numbers = #tpu.dot_dimension_numbers<[1], [0], [0], [1], [0, 0, 1, 1], [], []>} : vector<8x39xf32>, vector<39x128xf32>, vector<8x128xf32> -> vector<8x128xf32>
    %c0_3 = arith.constant 0 : index
    %c0_4 = arith.constant 0 : index
    %3 = vector.load %arg3[%c0_3, %c0_4] : memref<1x128xf32, #tpu.memory_space<vmem>>, vector<1x128xf32>
    %4 = vector.broadcast %3 : vector<1x128xf32> to vector<8x128xf32>
    %5 = arith.addf %2, %4 : vector<8x128xf32>
    %cst_5 = arith.constant 0.000000e+00 : f32
    %6 = vector.broadcast %cst_5 : f32 to vector<8x128xf32>
    %7 = arith.maximumf %5, %6 : vector<8x128xf32>
    %c0_6 = arith.constant 0 : index
    %c0_7 = arith.constant 0 : index
    %8 = vector.load %arg4[%c0_6, %c0_7] : memref<128x128xf32, #tpu.memory_space<vmem>>, vector<128x128xf32>
    %cst_8 = arith.constant dense<0.000000e+00> : vector<8x128xf32>
    %9 = tpu.matmul %7, %8, %cst_8 {dimension_numbers = #tpu.dot_dimension_numbers<[1], [0], [0], [1], [0, 0, 1, 1], [], []>} : vector<8x128xf32>, vector<128x128xf32>, vector<8x128xf32> -> vector<8x128xf32>
    %c0_9 = arith.constant 0 : index
    %c0_10 = arith.constant 0 : index
    %10 = vector.load %arg5[%c0_9, %c0_10] : memref<1x128xf32, #tpu.memory_space<vmem>>, vector<1x128xf32>
    %11 = vector.broadcast %10 : vector<1x128xf32> to vector<8x128xf32>
    %12 = arith.addf %9, %11 : vector<8x128xf32>
    %cst_11 = arith.constant 0.000000e+00 : f32
    %13 = vector.broadcast %cst_11 : f32 to vector<8x128xf32>
    %14 = arith.maximumf %12, %13 : vector<8x128xf32>
    %c0_12 = arith.constant 0 : index
    %c0_13 = arith.constant 0 : index
    %15 = vector.load %arg6[%c0_12, %c0_13] : memref<128x128xf32, #tpu.memory_space<vmem>>, vector<128x128xf32>
    %cst_14 = arith.constant dense<0.000000e+00> : vector<8x128xf32>
    %16 = tpu.matmul %14, %15, %cst_14 {dimension_numbers = #tpu.dot_dimension_numbers<[1], [0], [0], [1], [0, 0, 1, 1], [], []>} : vector<8x128xf32>, vector<128x128xf32>, vector<8x128xf32> -> vector<8x128xf32>
    %c0_15 = arith.constant 0 : index
    %c0_16 = arith.constant 0 : index
    %17 = vector.load %arg7[%c0_15, %c0_16] : memref<1x128xf32, #tpu.memory_space<vmem>>, vector<1x128xf32>
    %18 = vector.broadcast %17 : vector<1x128xf32> to vector<8x128xf32>
    %19 = arith.addf %16, %18 : vector<8x128xf32>
    %20 = math.tanh %19 : vector<8x128xf32>
    %cst_17 = arith.constant 2.000000e+00 : f32
    %21 = vector.broadcast %cst_17 : f32 to vector<8x128xf32>
    %22 = arith.mulf %21, %20 : vector<8x128xf32>
    %c0_18 = arith.constant 0 : index
    %c0_19 = arith.constant 0 : index
    %23 = vector.load %arg8[%c0_18, %c0_19] : memref<8x128xf32, #tpu.memory_space<vmem>>, vector<8x128xf32>
    tpu.vector_store %arg8[%c0_18, %c0_19], %22 {strides = array<i32>} : memref<8x128xf32, #tpu.memory_space<vmem>>, vector<8x128xf32>,
    return
  }
  func.func @transform_0(%arg0: i32) -> (i32, i32) {
    %c0_i32 = arith.constant 0 : i32
    %c0_i32_0 = arith.constant 0 : i32
    return %arg0, %c0_i32 : i32, i32
  }
  func.func @transform_1(%arg0: i32) -> (i32, i32) {
    %c0_i32 = arith.constant 0 : i32
    %c0_i32_0 = arith.constant 0 : i32
    %c0_i32_1 = arith.constant 0 : i32
    return %c0_i32, %c0_i32_0 : i32, i32
  }
  func.func @transform_2(%arg0: i32) -> (i32, i32) {
    %c0_i32 = arith.constant 0 : i32
    %c0_i32_0 = arith.constant 0 : i32
    %c0_i32_1 = arith.constant 0 : i32
    return %c0_i32, %c0_i32_0 : i32, i32
  }
  func.func @transform_3(%arg0: i32) -> (i32, i32) {
    %c0_i32 = arith.constant 0 : i32
    %c0_i32_0 = arith.constant 0 : i32
    %c0_i32_1 = arith.constant 0 : i32
    return %c0_i32, %c0_i32_0 : i32, i32
  }
  func.func @transform_4(%arg0: i32) -> (i32, i32) {
    %c0_i32 = arith.constant 0 : i32
    %c0_i32_0 = arith.constant 0 : i32
    %c0_i32_1 = arith.constant 0 : i32
    return %c0_i32, %c0_i32_0 : i32, i32
  }
  func.func @transform_5(%arg0: i32) -> (i32, i32) {
    %c0_i32 = arith.constant 0 : i32
    %c0_i32_0 = arith.constant 0 : i32
    %c0_i32_1 = arith.constant 0 : i32
    return %c0_i32, %c0_i32_0 : i32, i32
  }
  func.func @transform_6(%arg0: i32) -> (i32, i32) {
    %c0_i32 = arith.constant 0 : i32
    %c0_i32_0 = arith.constant 0 : i32
    %c0_i32_1 = arith.constant 0 : i32
    return %c0_i32, %c0_i32_0 : i32, i32
  }
  func.func @transform_7(%arg0: i32) -> (i32, i32) {
    %c0_i32 = arith.constant 0 : i32
    %c0_i32_0 = arith.constant 0 : i32
    return %arg0, %c0_i32 : i32, i32
  }
}

</mosaic_0001>

<llo_original>
// kernel: tpu_custom_call.1
$region0: #{tpu_custom_call.1}
  #allocation0 [shape = 'u32[]', space=smem, size = 0x4, offset = 0x4, fixed_abs, tag = 'smem constant byte address 0x4 - core index']
  #allocation1 [shape = 'u32[144,128]{1,0:T(1,128)}', space=vmem, size = 0x12000, scoped, tag = 'internal scratch']
  %s0 = inlined_call_operand.hbm [shape: f32[2,39], index: 0, kind: input, shape index: {}]
  %s1 = inlined_call_operand.hbm [shape: f32[39,128], index: 1, kind: input, shape index: {}]
  %s2 = inlined_call_operand.vmem [shape: f32[1,128], index: 2, kind: input, shape index: {}]
  %s3 = inlined_call_operand.hbm [shape: f32[128,128], index: 3, kind: input, shape index: {}]
  %s4 = inlined_call_operand.vmem [shape: f32[1,128], index: 4, kind: input, shape index: {}]
  %s5 = inlined_call_operand.hbm [shape: f32[128,128], index: 5, kind: input, shape index: {}]
  %s6 = inlined_call_operand.vmem [shape: f32[1,128], index: 6, kind: input, shape index: {}]
  %s7 = inlined_call_operand.hbm [shape: f32[2,128], index: 7, kind: output, shape index: {}]
  %s8 = sld [smem:[#allocation0]]
  $region54: #{tpu_custom_call.1} parent=0
    _
  %s10 = ssub.s32 1, %s8
  %s11 = scalar_select 0, %s10, %s8
  $region1: #{tpu_custom_call.1} parent=0
    #allocation2 [shape = 'u8[4096]{0}', space=vmem, size = 0x1000, scoped, tag = 'input window, operand 0, single buffered']
    #allocation3 [shape = 's32[1]{0}', space=sflag, size = 0x4, scoped, tag = 'scoped memory for tpu_custom_call.1']
    #allocation4 [shape = 's32[1]{0}', space=sflag, size = 0x4, scoped, tag = 'scoped memory for tpu_custom_call.1']
    #allocation5 [shape = 'u8[20480]{0}', space=vmem, size = 0x5000, scoped, tag = 'input window, operand 1, single buffered']
    #allocation6 [shape = 's32[1]{0}', space=sflag, size = 0x4, scoped, tag = 'scoped memory for tpu_custom_call.1']
    #allocation7 [shape = 'u8[65536]{0}', space=vmem, size = 0x10000, scoped, tag = 'input window, operand 3, single buffered']
    #allocation8 [shape = 'u8[65536]{0}', space=vmem, size = 0x10000, scoped, tag = 'input window, operand 5, single buffered']
    #allocation9 [shape = 's32[1]{0}', space=sflag, size = 0x4, scoped, tag = 'scoped memory for tpu_custom_call.1']
    #allocation10 [shape = 'u8[4096]{0}', space=vmem, size = 0x1000, scoped, tag = 'output window, operand 0, single buffered']
    %12 = vsyncpa [#allocation3], 0
    %13 = vsyncpa [#allocation6], 0
    %14 = vsyncpa [#allocation9], 0
    %15 = vsyncpa [#allocation4], 0
    // Predicated region
    $region2: #{tpu_custom_call.1} parent=1 // pred_check
      _
    $region3: #{tpu_custom_call.1} parent=1 // pred_check_branch
      %17 = sbr.rel (0) target = $region5
    $region4: #{tpu_custom_call.1} parent=1 // pred_region
      %s19 = ssub.s32 128, 32
      %20 = vsyncadd [#allocation3], %s19
      %s21 = sshll.u32 [#allocation2], 4
      %s22 = int_to_ptr.vmem [resolvable:$true] %s21
      %27 = dma.hbm_to_vmem [thread:$0]  %s0, 32, %s22, [#allocation3], 32, 32, 2
    $region5: #{tpu_custom_call.1} parent=1 // pred_fallthru
      _
    // Predicated region
    $region6: #{tpu_custom_call.1} parent=1 // pred_check
      _
    $region7: #{tpu_custom_call.1} parent=1 // pred_check_branch
      %29 = sbr.rel (0) target = $region9
    $region8: #{tpu_custom_call.1} parent=1 // pred_region
      %s31 = ssub.s32 640, 640
      %32 = vsyncadd [#allocation6], %s31
      %s33 = sshll.u32 [#allocation5], 4
      %s34 = int_to_ptr.vmem [resolvable:$true] %s33
      %39 = dma.hbm_to_vmem [thread:$0]  %s1, 640, %s34, [#allocation6], 128, 128, 8
    $region9: #{tpu_custom_call.1} parent=1 // pred_fallthru
      _
    // Predicated region
    $region10: #{tpu_custom_call.1} parent=1 // pred_check
      _
    $region11: #{tpu_custom_call.1} parent=1 // pred_check_branch
      %41 = sbr.rel (0) target = $region13
    $region12: #{tpu_custom_call.1} parent=1 // pred_region
      _
    $region13: #{tpu_custom_call.1} parent=1 // pred_fallthru
      _
    // Predicated region
    $region14: #{tpu_custom_call.1} parent=1 // pred_check
      _
    $region15: #{tpu_custom_call.1} parent=1 // pred_check_branch
      %43 = sbr.rel (0) target = $region17
    $region16: #{tpu_custom_call.1} parent=1 // pred_region
      %s45 = ssub.s32 2048, 2048
      %46 = vsyncadd [#allocation6], %s45
      %s47 = sshll.u32 [#allocation7], 4
      %s48 = int_to_ptr.vmem [resolvable:$true] %s47
      %53 = dma.hbm_to_vmem [thread:$0]  %s3, 2048, %s48, [#allocation6], 128, 128, 8
    $region17: #{tpu_custom_call.1} parent=1 // pred_fallthru
      _
    // Predicated region
    $region18: #{tpu_custom_call.1} parent=1 // pred_check
      _
    $region19: #{tpu_custom_call.1} parent=1 // pred_check_branch
      %55 = sbr.rel (0) target = $region21
    $region20: #{tpu_custom_call.1} parent=1 // pred_region
      _
    $region21: #{tpu_custom_call.1} parent=1 // pred_fallthru
      _
    // Predicated region
    $region22: #{tpu_custom_call.1} parent=1 // pred_check
      _
    $region23: #{tpu_custom_call.1} parent=1 // pred_check_branch
      %57 = sbr.rel (0) target = $region25
    $region24: #{tpu_custom_call.1} parent=1 // pred_region
      %s59 = ssub.s32 2048, 2048
      %60 = vsyncadd [#allocation9], %s59
      %s61 = sshll.u32 [#allocation8], 4
      %s62 = int_to_ptr.vmem [resolvable:$true] %s61
      %67 = dma.hbm_to_vmem [thread:$0]  %s5, 2048, %s62, [#allocation9], 128, 128, 8
    $region25: #{tpu_custom_call.1} parent=1 // pred_fallthru
      _
    // Predicated region
    $region26: #{tpu_custom_call.1} parent=1 // pred_check
      _
    $region27: #{tpu_custom_call.1} parent=1 // pred_check_branch
      %69 = sbr.rel (0) target = $region29
    $region28: #{tpu_custom_call.1} parent=1 // pred_region
      _
    $region29: #{tpu_custom_call.1} parent=1 // pred_fallthru
      _
    // Predicated region
    $region30: #{tpu_custom_call.1} parent=1 // pred_check
      _
    $region31: #{tpu_custom_call.1} parent=1 // pred_check_branch
      %71 = sbr.rel (0) target = $region33
    $region32: #{tpu_custom_call.1} parent=1 // pred_region
      %72 = dma.done [#allocation3], 128
    $region33: #{tpu_custom_call.1} parent=1 // pred_fallthru
      _
    // Predicated region
    $region34: #{tpu_custom_call.1} parent=1 // pred_check
      _
    $region35: #{tpu_custom_call.1} parent=1 // pred_check_branch
      %74 = sbr.rel (0) target = $region37
    $region36: #{tpu_custom_call.1} parent=1 // pred_region
      %75 = dma.done [#allocation6], 640
    $region37: #{tpu_custom_call.1} parent=1 // pred_fallthru
      _
    // Predicated region
    $region38: #{tpu_custom_call.1} parent=1 // pred_check
      _
    $region39: #{tpu_custom_call.1} parent=1 // pred_check_branch
      %77 = sbr.rel (0) target = $region41
    $region40: #{tpu_custom_call.1} parent=1 // pred_region
      %78 = dma.done [#allocation6], 2048
    $region41: #{tpu_custom_call.1} parent=1 // pred_fallthru
      _
    // Predicated region
    $region42: #{tpu_custom_call.1} parent=1 // pred_check
      _
    $region43: #{tpu_custom_call.1} parent=1 // pred_check_branch
      %80 = sbr.rel (0) target = $region45
    $region44: #{tpu_custom_call.1} parent=1 // pred_region
      %81 = dma.done [#allocation9], 2048
    $region45: #{tpu_custom_call.1} parent=1 // pred_fallthru
      _
    %v82 = vld [vmem:[#allocation2] sm:$0xff]
    %v83 = vld [vmem:[#allocation5] sm:$0xff]
    %v84 = vld [vmem:[#allocation5 + $0x8] sm:$0xff]
    %v85 = vld [vmem:[#allocation5 + $0x10] sm:$0xff]
    %v86 = vld [vmem:[#allocation5 + $0x18] sm:$0xff]
    %v87 = vld [vmem:[#allocation5 + $0x20] sm:$0x7f]
    %v88 = vld [vmem:[%s2] sm:$0x1]
    %v90 = vlaneseq
    %v91 = vshrl.u32 %v90, 7
    %v92 = vsub.s32 0, %v91
    %v93 = vrot.slane %v88, %v92
    %vm95 = vcmask 318464
    %v97 = vsel %vm95, %v82, 0
    %vm99 = vcmask 1046528
    %v101 = vsel %vm99, %v87, 0
    %103 = vmatprep.subr.mxu0 0.0
    %104 = vmatpush1.msra.mxu0 %v83
    %105 = vmatprep.subr.mxu0 0.0
    %106 = vmatpush1.msra.mxu0 %v84
    %107 = vmatprep.subr.mxu0 0.0
    %108 = vmatpush1.msra.mxu0 %v85
    %109 = vmatprep.subr.mxu0 0.0
    %110 = vmatpush1.msra.mxu0 %v86
    %111 = vmatprep.subr.mxu0 0.0
    %112 = vmatpush1.msra.mxu0 %v101
    %113 = vmatprep.subr.mxu0 0.0
    %114 = vmatpush1.msra.mxu0 0.0
    %115 = vmatprep.subr.mxu0 0.0
    %116 = vmatpush1.msra.mxu0 0.0
    %117 = vmatprep.subr.mxu0 0.0
    %118 = vmatpush1.msra.mxu0 0.0
    %119 = vmatprep.subr.mxu0 0.0
    %120 = vmatpush1.msra.mxu0 0.0
    %121 = vmatprep.subr.mxu0 0.0
    %122 = vmatpush1.msra.mxu0 0.0
    %123 = vmatprep.subr.mxu0 0.0
    %124 = vmatpush1.msra.mxu0 0.0
    %125 = vmatprep.subr.mxu0 0.0
    %126 = vmatpush1.msra.mxu0 0.0
    %127 = vmatprep.subr.mxu0 0.0
    %128 = vmatpush1.msra.mxu0 0.0
    %129 = vmatprep.subr.mxu0 0.0
    %130 = vmatpush1.msra.mxu0 0.0
    %131 = vmatprep.subr.mxu0 0.0
    %132 = vmatpush1.msra.mxu0 0.0
    %133 = vmatprep.subr.mxu0 0.0
    %134 = vmatpush1.msra.mxu0 0.0
    %135 = vmatprep.subr.mxu0 0.0
    %136 = vmatpush1.msra.mxu0 0.0
    %137 = vmatprep.subr.mxu0 0.0
    %138 = vmatpush1.msra.mxu0 0.0
    %139 = vmatprep.subr.mxu0 0.0
    %140 = vmatpush1.msra.mxu0 0.0
    %141 = vmatprep.subr.mxu0 0.0
    %142 = vmatpush1.msra.mxu0 0.0
    %143 = vmatprep.subr.mxu0 0.0
    %144 = vmatpush1.msra.mxu0 0.0
    %145 = vmatprep.subr.mxu0 0.0
    %146 = vmatpush1.msra.mxu0 0.0
    %147 = vmatprep.subr.mxu0 0.0
    %148 = vmatpush1.msra.mxu0 0.0
    %149 = vmatprep.subr.mxu0 0.0
    %150 = vmatpush1.msra.mxu0 0.0
    %151 = vmatprep.subr.mxu0 0.0
    %152 = vmatpush1.msra.mxu0 0.0
    %153 = vmatprep.subr.mxu0 0.0
    %154 = vmatpush1.msra.mxu0 0.0
    %155 = vmatprep.subr.mxu0 0.0
    %156 = vmatpush1.msra.mxu0 0.0
    %157 = vmatprep.subr.mxu0 0.0
    %158 = vmatpush1.msra.mxu0 0.0
    %159 = vmatprep.subr.mxu0 0.0
    %160 = vmatpush1.msra.mxu0 0.0
    %161 = vmatprep.subr.mxu0 0.0
    %162 = vmatpush1.msra.mxu0 0.0
    %163 = vmatprep.subr.mxu0 0.0
    %164 = vmatpush1.msra.mxu0 0.0
    %165 = vmatprep.subr.mxu0 0.0
    %166 = vmatpush1.msra.mxu0 0.0
    %167 = vmatprep.mubr.f32.mxu0 0.0
    %168 = vmatmul.mubr.f32.gmra.mrb[0].mxu0 %v97
    %v169 = vpop.f32.mrb[0].mxu0
    %v170 = vadd.f32 %v93, %v169
    %v171 = vpop.f32.mrb[0].mxu0
    %172 = vdwg.mxu0
    %v173 = vmax.f32 %v170, 0.0
    %v174 = vld [vmem:[#allocation7] sm:$0xff]
    %v175 = vld [vmem:[#allocation7 + $0x8] sm:$0xff]
    %v176 = vld [vmem:[#allocation7 + $0x10] sm:$0xff]
    %v177 = vld [vmem:[#allocation7 + $0x18] sm:$0xff]
    %v178 = vld [vmem:[#allocation7 + $0x20] sm:$0xff]
    %v179 = vld [vmem:[#allocation7 + $0x28] sm:$0xff]
    %v180 = vld [vmem:[#allocation7 + $0x30] sm:$0xff]
    %v181 = vld [vmem:[#allocation7 + $0x38] sm:$0xff]
    %v182 = vld [vmem:[#allocation7 + $0x40] sm:$0xff]
    %v183 = vld [vmem:[#allocation7 + $0x48] sm:$0xff]
    %v184 = vld [vmem:[#allocation7 + $0x50] sm:$0xff]
    %v185 = vld [vmem:[#allocation7 + $0x58] sm:$0xff]
    %v186 = vld [vmem:[#allocation7 + $0x60] sm:$0xff]
    %v187 = vld [vmem:[#allocation7 + $0x68] sm:$0xff]
    %v188 = vld [vmem:[#allocation7 + $0x70] sm:$0xff]
    %v189 = vld [vmem:[#allocation7 + $0x78] sm:$0xff]
    %v190 = vld [vmem:[%s4] sm:$0x1]
    %v192 = vlaneseq
    %v193 = vshrl.u32 %v192, 7
    %v194 = vsub.s32 0, %v193
    %v195 = vrot.slane %v190, %v194
    %197 = vmatprep.subr.mxu0 0.0
    %198 = vmatpush1.msra.mxu0 %v174
    %199 = vmatprep.subr.mxu0 0.0
    %200 = vmatpush1.msra.mxu0 %v175
    %201 = vmatprep.subr.mxu0 0.0
    %202 = vmatpush1.msra.mxu0 %v176
    %203 = vmatprep.subr.mxu0 0.0
    %204 = vmatpush1.msra.mxu0 %v177
    %205 = vmatprep.subr.mxu0 0.0
    %206 = vmatpush1.msra.mxu0 %v178
    %207 = vmatprep.subr.mxu0 0.0
    %208 = vmatpush1.msra.mxu0 %v179
    %209 = vmatprep.subr.mxu0 0.0
    %210 = vmatpush1.msra.mxu0 %v180
    %211 = vmatprep.subr.mxu0 0.0
    %212 = vmatpush1.msra.mxu0 %v181
    %213 = vmatprep.subr.mxu0 0.0
    %214 = vmatpush1.msra.mxu0 %v182
    %215 = vmatprep.subr.mxu0 0.0
    %216 = vmatpush1.msra.mxu0 %v183
    %217 = vmatprep.subr.mxu0 0.0
    %218 = vmatpush1.msra.mxu0 %v184
    %219 = vmatprep.subr.mxu0 0.0
    %220 = vmatpush1.msra.mxu0 %v185
    %221 = vmatprep.subr.mxu0 0.0
    %222 = vmatpush1.msra.mxu0 %v186
    %223 = vmatprep.subr.mxu0 0.0
    %224 = vmatpush1.msra.mxu0 %v187
    %225 = vmatprep.subr.mxu0 0.0
    %226 = vmatpush1.msra.mxu0 %v188
    %227 = vmatprep.subr.mxu0 0.0
    %228 = vmatpush1.msra.mxu0 %v189
    %229 = vmatprep.subr.mxu0 0.0
    %230 = vmatpush1.msra.mxu0 0.0
    %231 = vmatprep.subr.mxu0 0.0
    %232 = vmatpush1.msra.mxu0 0.0
    %233 = vmatprep.subr.mxu0 0.0
    %234 = vmatpush1.msra.mxu0 0.0
    %235 = vmatprep.subr.mxu0 0.0
    %236 = vmatpush1.msra.mxu0 0.0
    %237 = vmatprep.subr.mxu0 0.0
    %238 = vmatpush1.msra.mxu0 0.0
    %239 = vmatprep.subr.mxu0 0.0
    %240 = vmatpush1.msra.mxu0 0.0
    %241 = vmatprep.subr.mxu0 0.0
    %242 = vmatpush1.msra.mxu0 0.0
    %243 = vmatprep.subr.mxu0 0.0
    %244 = vmatpush1.msra.mxu0 0.0
    %245 = vmatprep.subr.mxu0 0.0
    %246 = vmatpush1.msra.mxu0 0.0
    %247 = vmatprep.subr.mxu0 0.0
    %248 = vmatpush1.msra.mxu0 0.0
    %249 = vmatprep.subr.mxu0 0.0
    %250 = vmatpush1.msra.mxu0 0.0
    %251 = vmatprep.subr.mxu0 0.0
    %252 = vmatpush1.msra.mxu0 0.0
    %253 = vmatprep.subr.mxu0 0.0
    %254 = vmatpush1.msra.mxu0 0.0
    %255 = vmatprep.subr.mxu0 0.0
    %256 = vmatpush1.msra.mxu0 0.0
    %257 = vmatprep.subr.mxu0 0.0
    %258 = vmatpush1.msra.mxu0 0.0
    %259 = vmatprep.subr.mxu0 0.0
    %260 = vmatpush1.msra.mxu0 0.0
    %261 = vmatprep.mubr.f32.mxu0 0.0
    %262 = vmatmul.mubr.f32.gmra.mrb[0].mxu0 %v173
    %v263 = vpop.f32.mrb[0].mxu0
    %v264 = vadd.f32 %v195, %v263
    %v265 = vpop.f32.mrb[0].mxu0
    %266 = vdwg.mxu0
    %v267 = vmax.f32 %v264, 0.0
    %v268 = vld [vmem:[#allocation8] sm:$0xff]
    %v269 = vld [vmem:[#allocation8 + $0x8] sm:$0xff]
    %v270 = vld [vmem:[#allocation8 + $0x10] sm:$0xff]
    %v271 = vld [vmem:[#allocation8 + $0x18] sm:$0xff]
    %v272 = vld [vmem:[#allocation8 + $0x20] sm:$0xff]
    %v273 = vld [vmem:[#allocation8 + $0x28] sm:$0xff]
    %v274 = vld [vmem:[#allocation8 + $0x30] sm:$0xff]
    %v275 = vld [vmem:[#allocation8 + $0x38] sm:$0xff]
    %v276 = vld [vmem:[#allocation8 + $0x40] sm:$0xff]
    %v277 = vld [vmem:[#allocation8 + $0x48] sm:$0xff]
    %v278 = vld [vmem:[#allocation8 + $0x50] sm:$0xff]
    %v279 = vld [vmem:[#allocation8 + $0x58] sm:$0xff]
    %v280 = vld [vmem:[#allocation8 + $0x60] sm:$0xff]
    %v281 = vld [vmem:[#allocation8 + $0x68] sm:$0xff]
    %v282 = vld [vmem:[#allocation8 + $0x70] sm:$0xff]
    %v283 = vld [vmem:[#allocation8 + $0x78] sm:$0xff]
    %v284 = vld [vmem:[%s6] sm:$0x1]
    %v286 = vlaneseq
    %v287 = vshrl.u32 %v286, 7
    %v288 = vsub.s32 0, %v287
    %v289 = vrot.slane %v284, %v288
    %291 = vmatprep.subr.mxu0 0.0
    %292 = vmatpush1.msra.mxu0 %v268
    %293 = vmatprep.subr.mxu0 0.0
    %294 = vmatpush1.msra.mxu0 %v269
    %295 = vmatprep.subr.mxu0 0.0
    %296 = vmatpush1.msra.mxu0 %v270
    %297 = vmatprep.subr.mxu0 0.0
    %298 = vmatpush1.msra.mxu0 %v271
    %299 = vmatprep.subr.mxu0 0.0
    %300 = vmatpush1.msra.mxu0 %v272
    %301 = vmatprep.subr.mxu0 0.0
    %302 = vmatpush1.msra.mxu0 %v273
    %303 = vmatprep.subr.mxu0 0.0
    %304 = vmatpush1.msra.mxu0 %v274
    %305 = vmatprep.subr.mxu0 0.0
    %306 = vmatpush1.msra.mxu0 %v275
    %307 = vmatprep.subr.mxu0 0.0
    %308 = vmatpush1.msra.mxu0 %v276
    %309 = vmatprep.subr.mxu0 0.0
    %310 = vmatpush1.msra.mxu0 %v277
    %311 = vmatprep.subr.mxu0 0.0
    %312 = vmatpush1.msra.mxu0 %v278
    %313 = vmatprep.subr.mxu0 0.0
    %314 = vmatpush1.msra.mxu0 %v279
    %315 = vmatprep.subr.mxu0 0.0
    %316 = vmatpush1.msra.mxu0 %v280
    %317 = vmatprep.subr.mxu0 0.0
    %318 = vmatpush1.msra.mxu0 %v281
    %319 = vmatprep.subr.mxu0 0.0
    %320 = vmatpush1.msra.mxu0 %v282
    %321 = vmatprep.subr.mxu0 0.0
    %322 = vmatpush1.msra.mxu0 %v283
    %323 = vmatprep.subr.mxu0 0.0
    %324 = vmatpush1.msra.mxu0 0.0
    %325 = vmatprep.subr.mxu0 0.0
    %326 = vmatpush1.msra.mxu0 0.0
    %327 = vmatprep.subr.mxu0 0.0
    %328 = vmatpush1.msra.mxu0 0.0
    %329 = vmatprep.subr.mxu0 0.0
    %330 = vmatpush1.msra.mxu0 0.0
    %331 = vmatprep.subr.mxu0 0.0
    %332 = vmatpush1.msra.mxu0 0.0
    %333 = vmatprep.subr.mxu0 0.0
    %334 = vmatpush1.msra.mxu0 0.0
    %335 = vmatprep.subr.mxu0 0.0
    %336 = vmatpush1.msra.mxu0 0.0
    %337 = vmatprep.subr.mxu0 0.0
    %338 = vmatpush1.msra.mxu0 0.0
    %339 = vmatprep.subr.mxu0 0.0
    %340 = vmatpush1.msra.mxu0 0.0
    %341 = vmatprep.subr.mxu0 0.0
    %342 = vmatpush1.msra.mxu0 0.0
    %343 = vmatprep.subr.mxu0 0.0
    %344 = vmatpush1.msra.mxu0 0.0
    %345 = vmatprep.subr.mxu0 0.0
    %346 = vmatpush1.msra.mxu0 0.0
    %347 = vmatprep.subr.mxu0 0.0
    %348 = vmatpush1.msra.mxu0 0.0
    %349 = vmatprep.subr.mxu0 0.0
    %350 = vmatpush1.msra.mxu0 0.0
    %351 = vmatprep.subr.mxu0 0.0
    %352 = vmatpush1.msra.mxu0 0.0
    %353 = vmatprep.subr.mxu0 0.0
    %354 = vmatpush1.msra.mxu0 0.0
    %355 = vmatprep.mubr.f32.mxu0 0.0
    %356 = vmatmul.mubr.f32.gmra.mrb[0].mxu0 %v267
    %v357 = vpop.f32.mrb[0].mxu0
    %v358 = vadd.f32 %v289, %v357
    %v359 = vpop.f32.mrb[0].mxu0
    %360 = vdwg.mxu0
    %v361 = vtanh.pop %v358
    %v362 = vmul.f32 %v361, 2.0
    %363 = vst [vmem:[#allocation10] sm:$0xff] %v362
    // Predicated region
    $region46: #{tpu_custom_call.1} parent=1 // pred_check
      _
    $region47: #{tpu_custom_call.1} parent=1 // pred_check_branch
      %365 = sbr.rel (0) target = $region49
    $region48: #{tpu_custom_call.1} parent=1 // pred_region
      %s367 = ssub.s32 128, 32
      %368 = vsyncadd [#allocation4], %s367
      %s369 = sshll.u32 [#allocation10], 4
      %s370 = int_to_ptr.vmem [resolvable:$true] %s369
      %375 = dma.vmem_to_hbm [thread:$0]  %s370, 32, %s7, [#allocation4], 32, 32, 2
    $region49: #{tpu_custom_call.1} parent=1 // pred_fallthru
      _
    // Predicated region
    $region50: #{tpu_custom_call.1} parent=1 // pred_check
      _
    $region51: #{tpu_custom_call.1} parent=1 // pred_check_branch
      %377 = sbr.rel (0) target = $region53
    $region52: #{tpu_custom_call.1} parent=1 // pred_region
      %378 = dma.done [#allocation4], 128
    $region53: #{tpu_custom_call.1} parent=1 // pred_fallthru
      _
    %379 = vsyncpa [#allocation3], 1
    %380 = vsyncpa [#allocation6], 1
    %381 = vsyncpa [#allocation9], 1
    %382 = vsyncpa [#allocation4], 1

</llo_original>
